<compile_context>
chip_gen: v6e
topology: v6e:2x2x1
jax: 0.10.0
libtpu: 0.0.40
codegen_flags: <defaults>
</compile_context>

<pallas_src>
import math

import jax
import jax.numpy as jnp
from jax.experimental import pallas as pl
from jax.experimental.pallas import tpu as pltpu


def _fused_kernel(t01_ref, ta_ref, x_ref, o_ref):
    # forward: sub_mod_0(x) + sub_mod_1(x) + tensor
    #        = (t0 + t1) * x + t_add
    # t01 = t0 + t1 is pre-folded once at module setup (not per call), so only
    # 3 input streams + 1 output stream hit HBM.  Pure VPU work.
    o_ref[...] = t01_ref[...] * x_ref[...] + ta_ref[...]


_LANE_CANDIDATES = (8192, 4096, 2048, 1024, 512, 256, 128)   # wide -> narrow
_SUBLANE_PACK = {4: 8, 2: 16, 1: 32, 8: 8}                   # rows per packed vreg
_MIB = 1024 * 1024


def _chip_tuning():
    """Per-generation (target block bytes, vmem_limit_bytes or None)."""
    try:
        kind = jax.devices()[0].device_kind.lower()
    except Exception:  # pragma: no cover - defensive
        kind = ""
    if "v2" in kind or "v3" in kind or "v4" in kind or "v5" in kind:
        # ~820 GB/s HBM: per-step DMA time dwarfs the ~0.35us step overhead, so
        # big tiles buy nothing; stay under the 16 MiB scoped-VMEM default.
        return 1 * _MIB, None
    if "v6" in kind:
        # 128 MiB VMEM, ~1.3 TB/s HBM: amortize step overhead with 4 MiB tiles.
        return 4 * _MIB, 64 * _MIB
    # v7x (and unknown future chips): assume the smaller 64 MiB physical VMEM.
    return 4 * _MIB, 56 * _MIB


def _tiled_call(t01_2d, ta_2d, x_2d, rows, width, itemsize):
    """Lane-dense 1-D-grid pipelined call on (rows, width) slabs."""
    target_block_bytes, vmem_limit = _chip_tuning()
    sublane = _SUBLANE_PACK.get(itemsize, 8)

    bytes_per_row = width * itemsize
    block_rows = max(1, target_block_bytes // bytes_per_row)
    block_rows = max(sublane, (block_rows // sublane) * sublane)
    block_rows = min(block_rows, rows)  # full extent is always a legal block dim

    # Guarantee >= 2 grid steps when possible so v7x's two TensorCores can each
    # drive HBM on the "parallel" axis (neutral on single-TC v5e/v6e).
    if block_rows == rows and rows >= 2 * sublane:
        block_rows = max(sublane, ((rows // 2) // sublane) * sublane)

    grid_rows = pl.cdiv(rows, block_rows)  # partial last block is masked
    spec = pl.BlockSpec((block_rows, width), lambda i: (i, 0))

    params = dict(dimension_semantics=("parallel",))
    if vmem_limit is not None:
        params["vmem_limit_bytes"] = vmem_limit
    compiler_params = pltpu.CompilerParams(**params)

    return pl.pallas_call(
        _fused_kernel,
        out_shape=jax.ShapeDtypeStruct((rows, width), x_2d.dtype),
        grid_spec=pltpu.PrefetchScalarGridSpec(
            num_scalar_prefetch=0,
            grid=(grid_rows,),
            in_specs=[spec, spec, spec],
            out_specs=spec,
        ),
        compiler_params=compiler_params,
    )(t01_2d, ta_2d, x_2d)


def make_mod_with_two_submods_and_tensor(tensor, sub0_tensor, sub1_tensor):
    """Build the fused forward.

    The two submodule multiplier tensors are folded ONCE here (module/param
    setup time, not per call), dropping one of the five HBM streams.
    """
    assert tensor.shape == sub0_tensor.shape == sub1_tensor.shape
    assert tensor.dtype == sub0_tensor.dtype == sub1_tensor.dtype
    t01 = sub0_tensor + sub1_tensor  # setup-time fold: (t0 + t1)

    def forward(x):
        assert x.shape == tensor.shape and x.dtype == tensor.dtype
        orig_shape = x.shape
        total = math.prod(orig_shape)
        itemsize = jnp.dtype(x.dtype).itemsize

        # Pick a lane-dense 2-D slab (rows, width) that divides `total`
        # exactly: no pad and no output slice on the common path.
        width = None
        for cand in _LANE_CANDIDATES:
            if total % cand == 0:
                width = cand
                break

        if width is not None:
            rows = total // width
            out2 = _tiled_call(
                t01.reshape(rows, width),
                tensor.reshape(rows, width),
                x.reshape(rows, width),
                rows, width, itemsize,
            )
            return out2.reshape(orig_shape)

        # Ragged fallback: element count not a multiple of 128.  Pad the flat
        # arrays once to a lane-dense width, reuse the tiled/pipelined path
        # (bounded VMEM, full DMA/compute overlap), then slice the result.
        # TODO(synk): a masked-trailing-block variant would avoid the pad copies.
        width = 512
        padded = ((total + width - 1) // width) * width
        pad = padded - total
        rows = padded // width

        def prep(a):
            return jnp.pad(a.reshape(-1), (0, pad)).reshape(rows, width)

        out2 = _tiled_call(prep(t01), prep(tensor), prep(x), rows, width, itemsize)
        return out2.reshape(-1)[:total].reshape(orig_shape)

    return forward


if __name__ == "__main__":
    # ModWithTwoSubmodsAndTensor(tensor, ModWithTensor(t0), ModWithTensor(t1))
    B, C, H, W = 2, 4, 16, 16
    key = jax.random.PRNGKey(0)
    k_t, k_0, k_1, k_x = jax.random.split(key, 4)

    stored_tensor = jax.random.normal(k_t, (B, C, H, W), dtype=jnp.float32)
    sub0_tensor = jax.random.normal(k_0, (B, C, H, W), dtype=jnp.float32)
    sub1_tensor = jax.random.normal(k_1, (B, C, H, W), dtype=jnp.float32)
    x = jax.random.normal(k_x, (B, C, H, W), dtype=jnp.float32)

    forward = make_mod_with_two_submods_and_tensor(
        stored_tensor, sub0_tensor, sub1_tensor
    )
    out = jax.block_until_ready(forward(x))

    # Reference follows the original (un-folded) PyTorch expression; the
    # (t0+t1)*x reassociation differs by ~1 ulp in f32.
    ref = sub0_tensor * x + sub1_tensor * x + stored_tensor
    assert out.shape == (B, C, H, W)
    assert jnp.allclose(out, ref, atol=1e-5, rtol=1e-5)
    print("KERNEL_OK")
</pallas_src>

<mosaic_0001>
module attributes {stable_mosaic.version = 11 : i64} {
  func.func @_fused_kernel(%arg0: i32, %arg1: memref<1x2048xf32, #tpu.memory_space<vmem>>, %arg2: memref<1x2048xf32, #tpu.memory_space<vmem>>, %arg3: memref<1x2048xf32, #tpu.memory_space<vmem>>, %arg4: memref<1x2048xf32, #tpu.memory_space<vmem>>) attributes {dimension_semantics = [#tpu.dimension_semantics<parallel>], iteration_bounds = array<i64: 1>, scalar_prefetch = 0 : i64, scratch_operands = 0 : i64, tpu.core_type = #tpu.core_type<tc>, window_params = [{transform_indices = @transform_0, window_bounds = array<i64: 1, 2048>}, {transform_indices = @transform_1, window_bounds = array<i64: 1, 2048>}, {transform_indices = @transform_2, window_bounds = array<i64: 1, 2048>}, {transform_indices = @transform_3, window_bounds = array<i64: 1, 2048>}]} {
    %c0 = arith.constant 0 : index
    %c0_0 = arith.constant 0 : index
    %0 = vector.load %arg1[%c0, %c0_0] : memref<1x2048xf32, #tpu.memory_space<vmem>>, vector<1x2048xf32>
    %c0_1 = arith.constant 0 : index
    %c0_2 = arith.constant 0 : index
    %1 = vector.load %arg3[%c0_1, %c0_2] : memref<1x2048xf32, #tpu.memory_space<vmem>>, vector<1x2048xf32>
    %2 = arith.mulf %0, %1 : vector<1x2048xf32>
    %c0_3 = arith.constant 0 : index
    %c0_4 = arith.constant 0 : index
    %3 = vector.load %arg2[%c0_3, %c0_4] : memref<1x2048xf32, #tpu.memory_space<vmem>>, vector<1x2048xf32>
    %4 = arith.addf %2, %3 : vector<1x2048xf32>
    %c0_5 = arith.constant 0 : index
    %c0_6 = arith.constant 0 : index
    %5 = vector.load %arg4[%c0_5, %c0_6] : memref<1x2048xf32, #tpu.memory_space<vmem>>, vector<1x2048xf32>
    tpu.vector_store %arg4[%c0_5, %c0_6], %4 {strides = array<i32>} : memref<1x2048xf32, #tpu.memory_space<vmem>>, vector<1x2048xf32>,
    return
  }
  func.func @transform_0(%arg0: i32) -> (i32, i32) {
    %c0_i32 = arith.constant 0 : i32
    %c0_i32_0 = arith.constant 0 : i32
    return %arg0, %c0_i32 : i32, i32
  }
  func.func @transform_1(%arg0: i32) -> (i32, i32) {
    %c0_i32 = arith.constant 0 : i32
    %c0_i32_0 = arith.constant 0 : i32
    return %arg0, %c0_i32 : i32, i32
  }
  func.func @transform_2(%arg0: i32) -> (i32, i32) {
    %c0_i32 = arith.constant 0 : i32
    %c0_i32_0 = arith.constant 0 : i32
    return %arg0, %c0_i32 : i32, i32
  }
  func.func @transform_3(%arg0: i32) -> (i32, i32) {
    %c0_i32 = arith.constant 0 : i32
    %c0_i32_0 = arith.constant 0 : i32
    return %arg0, %c0_i32 : i32, i32
  }
}

</mosaic_0001>

<llo_original>
// kernel: tpu_custom_call.1
$region0: #{tpu_custom_call.1}
  #allocation0 [shape = 'u32[]', space=smem, size = 0x4, offset = 0x4, fixed_abs, tag = 'smem constant byte address 0x4 - core index']
  #allocation1 [shape = 'u32[144,128]{1,0:T(1,128)}', space=vmem, size = 0x12000, scoped, tag = 'internal scratch']
  %s0 = inlined_call_operand.hbm [shape: f32[1,2048], index: 0, kind: input, shape index: {}]
  %s1 = inlined_call_operand.hbm [shape: f32[1,2048], index: 1, kind: input, shape index: {}]
  %s2 = inlined_call_operand.hbm [shape: f32[1,2048], index: 2, kind: input, shape index: {}]
  %s3 = inlined_call_operand.hbm [shape: f32[1,2048], index: 3, kind: output, shape index: {}]
  %s4 = sld [smem:[#allocation0]]
  $region34: #{tpu_custom_call.1} parent=0
    _
  %s6 = ssub.s32 1, %s4
  %s7 = scalar_select 0, %s6, %s4
  $region1: #{tpu_custom_call.1} parent=0
    #allocation2 [shape = 'u8[8192]{0}', space=vmem, size = 0x2000, scoped, tag = 'input window, operand 0, single buffered']
    #allocation3 [shape = 's32[1]{0}', space=sflag, size = 0x4, scoped, tag = 'scoped memory for tpu_custom_call.1']
    #allocation4 [shape = 's32[1]{0}', space=sflag, size = 0x4, scoped, tag = 'scoped memory for tpu_custom_call.1']
    #allocation5 [shape = 'u8[8192]{0}', space=vmem, size = 0x2000, scoped, tag = 'input window, operand 1, single buffered']
    #allocation6 [shape = 's32[1]{0}', space=sflag, size = 0x4, scoped, tag = 'scoped memory for tpu_custom_call.1']
    #allocation7 [shape = 'u8[8192]{0}', space=vmem, size = 0x2000, scoped, tag = 'input window, operand 2, single buffered']
    #allocation8 [shape = 'u8[8192]{0}', space=vmem, size = 0x2000, scoped, tag = 'output window, operand 0, single buffered']
    %8 = vsyncpa [#allocation3], 0
    %9 = vsyncpa [#allocation6], 0
    %10 = vsyncpa [#allocation4], 0
    // Predicated region
    $region2: #{tpu_custom_call.1} parent=1 // pred_check
      _
    $region3: #{tpu_custom_call.1} parent=1 // pred_check_branch
      %12 = sbr.rel (0) target = $region5
    $region4: #{tpu_custom_call.1} parent=1 // pred_region
      %s14 = ssub.s32 256, 256
      %15 = vsyncadd [#allocation3], %s14
      %s17 = sshll.u32 [#allocation2], 4
      %s18 = int_to_ptr.vmem [resolvable:$true] %s17
      %20 = dma.hbm_to_vmem [thread:$0]  %s0, 256, %s18, [#allocation3]
    $region5: #{tpu_custom_call.1} parent=1 // pred_fallthru
      _
    // Predicated region
    $region6: #{tpu_custom_call.1} parent=1 // pred_check
      _
    $region7: #{tpu_custom_call.1} parent=1 // pred_check_branch
      %22 = sbr.rel (0) target = $region9
    $region8: #{tpu_custom_call.1} parent=1 // pred_region
      %s24 = ssub.s32 256, 256
      %25 = vsyncadd [#allocation6], %s24
      %s27 = sshll.u32 [#allocation5], 4
      %s28 = int_to_ptr.vmem [resolvable:$true] %s27
      %30 = dma.hbm_to_vmem [thread:$0]  %s1, 256, %s28, [#allocation6]
    $region9: #{tpu_custom_call.1} parent=1 // pred_fallthru
      _
    // Predicated region
    $region10: #{tpu_custom_call.1} parent=1 // pred_check
      _
    $region11: #{tpu_custom_call.1} parent=1 // pred_check_branch
      %32 = sbr.rel (0) target = $region13
    $region12: #{tpu_custom_call.1} parent=1 // pred_region
      %s34 = ssub.s32 256, 256
      %35 = vsyncadd [#allocation6], %s34
      %s37 = sshll.u32 [#allocation7], 4
      %s38 = int_to_ptr.vmem [resolvable:$true] %s37
      %40 = dma.hbm_to_vmem [thread:$0]  %s2, 256, %s38, [#allocation6]
    $region13: #{tpu_custom_call.1} parent=1 // pred_fallthru
      _
    // Predicated region
    $region14: #{tpu_custom_call.1} parent=1 // pred_check
      _
    $region15: #{tpu_custom_call.1} parent=1 // pred_check_branch
      %42 = sbr.rel (0) target = $region17
    $region16: #{tpu_custom_call.1} parent=1 // pred_region
      %43 = dma.done [#allocation3], 256
    $region17: #{tpu_custom_call.1} parent=1 // pred_fallthru
      _
    // Predicated region
    $region18: #{tpu_custom_call.1} parent=1 // pred_check
      _
    $region19: #{tpu_custom_call.1} parent=1 // pred_check_branch
      %45 = sbr.rel (0) target = $region21
    $region20: #{tpu_custom_call.1} parent=1 // pred_region
      %46 = dma.done [#allocation6], 256
    $region21: #{tpu_custom_call.1} parent=1 // pred_fallthru
      _
    // Predicated region
    $region22: #{tpu_custom_call.1} parent=1 // pred_check
      _
    $region23: #{tpu_custom_call.1} parent=1 // pred_check_branch
      %48 = sbr.rel (0) target = $region25
    $region24: #{tpu_custom_call.1} parent=1 // pred_region
      %49 = dma.done [#allocation6], 256
    $region25: #{tpu_custom_call.1} parent=1 // pred_fallthru
      _
    %v50 = vld [vmem:[#allocation2] sm:$0xff]
    %v51 = vld [vmem:[#allocation2 + $0x8] sm:$0xff]
    %v52 = vld [vmem:[#allocation7] sm:$0xff]
    %v53 = vld [vmem:[#allocation7 + $0x8] sm:$0xff]
    %v54 = vmul.f32 %v50, %v52
    %v55 = vmul.f32 %v51, %v53
    %v56 = vld [vmem:[#allocation5] sm:$0xff]
    %v57 = vld [vmem:[#allocation5 + $0x8] sm:$0xff]
    %v58 = vadd.f32 %v54, %v56
    %v59 = vadd.f32 %v55, %v57
    %60 = vst [vmem:[#allocation8] sm:$0xff] %v58
    %61 = vst [vmem:[#allocation8 + $0x8] sm:$0xff] %v59
    // Predicated region
    $region26: #{tpu_custom_call.1} parent=1 // pred_check
      _
    $region27: #{tpu_custom_call.1} parent=1 // pred_check_branch
      %63 = sbr.rel (0) target = $region29
    $region28: #{tpu_custom_call.1} parent=1 // pred_region
      %s65 = ssub.s32 256, 256
      %66 = vsyncadd [#allocation4], %s65
      %s68 = sshll.u32 [#allocation8], 4
      %s69 = int_to_ptr.vmem [resolvable:$true] %s68
      %71 = dma.vmem_to_hbm [thread:$0]  %s69, 256, %s3, [#allocation4]
    $region29: #{tpu_custom_call.1} parent=1 // pred_fallthru
      _
    // Predicated region
    $region30: #{tpu_custom_call.1} parent=1 // pred_check
      _
    $region31: #{tpu_custom_call.1} parent=1 // pred_check_branch
      %73 = sbr.rel (0) target = $region33
    $region32: #{tpu_custom_call.1} parent=1 // pred_region
      %74 = dma.done [#allocation4], 256
    $region33: #{tpu_custom_call.1} parent=1 // pred_fallthru
      _
    %75 = vsyncpa [#allocation3], 1
    %76 = vsyncpa [#allocation6], 1
    %77 = vsyncpa [#allocation4], 1

</llo_original>
